<compile_context>
chip_gen: v6e
topology: v6e:2x2x1
jax: 0.10.0
libtpu: 0.0.40
codegen_flags: <defaults>
</compile_context>

<pallas_src>
import jax
import jax.numpy as jnp
from jax.experimental import pallas as pl
from jax.experimental.pallas import tpu as pltpu

INPUT_SIZE = 3          # len(predictor_feature)
HIDDEN = 36             # no_nodes
NUM_HIDDEN_LAYERS = 10  # no_hidden_layers
NUM_OUTPUTS = 3         # len(predicted_feature)
OUT_PAD = 128           # lane-dense output slab width
NEG_SLOPE = 0.01
BN_EPS = 1e-5
TILE_BATCH = 256        # batch rows per grid step (fits vregs / VMEM on v5e/v6e/v7x)


def _leaky_relu(x):
    return jnp.where(x >= 0, x, NEG_SLOPE * x)


def mlp_kernel(x_ref, w0_ref, b0_ref, wm_ref, bm_ref, wf_ref, bf_ref, o_ref):
    # first block: Linear(3->36) with BN folded into (w0, b0), then LeakyReLU
    h = jnp.dot(x_ref[...], w0_ref[...], preferred_element_type=jnp.float32)
    h = _leaky_relu(h + b0_ref[...])

    # 9 middle blocks: Linear(36->36) (BN folded), LeakyReLU, Dropout=identity
    for i in range(NUM_HIDDEN_LAYERS - 1):   # static unroll: 9 tiny matmuls
        h = jnp.dot(h, wm_ref[i], preferred_element_type=jnp.float32) + bm_ref[i]
        h = _leaky_relu(h)

    # final Linear(36->3), zero-padded to 128 lanes for a lane-dense store
    out = jnp.dot(h, wf_ref[...], preferred_element_type=jnp.float32) + bf_ref[...]
    o_ref[...] = _leaky_relu(out)


def init_params(key):
    """Deterministic parameter init matching the PyTorch module's shapes."""
    ks = jax.random.split(key, 64)
    ki = iter(range(64))
    params = {}

    def nxt():
        return ks[next(ki)]

    # layer 0: Linear(3, 36) + BN(36)
    params["w0"] = jax.random.normal(nxt(), (INPUT_SIZE, HIDDEN), jnp.float32) * 0.3
    params["b0"] = jax.random.normal(nxt(), (1, HIDDEN), jnp.float32) * 0.1
    params["g0"] = 1.0 + 0.1 * jax.random.normal(nxt(), (1, HIDDEN), jnp.float32)
    params["be0"] = 0.1 * jax.random.normal(nxt(), (1, HIDDEN), jnp.float32)
    params["rm0"] = 0.05 * jax.random.normal(nxt(), (1, HIDDEN), jnp.float32)
    params["rv0"] = 0.5 + jax.random.uniform(nxt(), (1, HIDDEN), jnp.float32)

    # 9 middle layers: Linear(36, 36) + BN(36), stacked
    nmid = NUM_HIDDEN_LAYERS - 1
    params["wm"] = jax.random.normal(nxt(), (nmid, HIDDEN, HIDDEN), jnp.float32) * 0.15
    params["bm"] = jax.random.normal(nxt(), (nmid, 1, HIDDEN), jnp.float32) * 0.1
    params["gm"] = 1.0 + 0.1 * jax.random.normal(nxt(), (nmid, 1, HIDDEN), jnp.float32)
    params["bem"] = 0.1 * jax.random.normal(nxt(), (nmid, 1, HIDDEN), jnp.float32)
    params["rmm"] = 0.05 * jax.random.normal(nxt(), (nmid, 1, HIDDEN), jnp.float32)
    params["rvm"] = 0.5 + jax.random.uniform(nxt(), (nmid, 1, HIDDEN), jnp.float32)

    # final layer: Linear(36, 3)
    params["wf"] = jax.random.normal(nxt(), (HIDDEN, NUM_OUTPUTS), jnp.float32) * 0.2
    params["bf"] = jax.random.normal(nxt(), (1, NUM_OUTPUTS), jnp.float32) * 0.1
    return params


def fold_bn(gamma, beta, rmean, rvar):
    """Fold eval-mode BatchNorm1d into per-feature scale/shift."""
    scale = gamma / jnp.sqrt(rvar + BN_EPS)
    shift = beta - rmean * scale
    return scale, shift


def _fold_params(params):
    """Fold BN into the Linear weights/biases and lane-pad the final layer."""
    sc0, sh0 = fold_bn(params["g0"], params["be0"], params["rm0"], params["rv0"])
    scm, shm = fold_bn(params["gm"], params["bem"], params["rmm"], params["rvm"])

    w0f = params["w0"] * sc0                      # (3, 36)  * (1, 36)
    b0f = params["b0"] * sc0 + sh0                # (1, 36)
    wmf = params["wm"] * scm                      # (9, 36, 36) * (9, 1, 36)
    bmf = params["bm"] * scm + shm                # (9, 1, 36)

    wf_pad = jnp.zeros((HIDDEN, OUT_PAD), jnp.float32)
    wf_pad = wf_pad.at[:, :NUM_OUTPUTS].set(params["wf"])
    bf_pad = jnp.zeros((1, OUT_PAD), jnp.float32)
    bf_pad = bf_pad.at[:, :NUM_OUTPUTS].set(params["bf"])
    return w0f, b0f, wmf, bmf, wf_pad, bf_pad


def neural_network_forward(x, params, tile_batch=TILE_BATCH):
    w0f, b0f, wmf, bmf, wf_pad, bf_pad = _fold_params(params)

    n = x.shape[0]
    # batch tile: multiple of 8 sublanes, capped at tile_batch
    tb = min(tile_batch, ((n + 7) // 8) * 8)
    n_pad = pl.cdiv(n, tb) * tb
    if n_pad != n:
        x = jnp.pad(x, ((0, n_pad - n), (0, 0)))
    grid = (n_pad // tb,)

    def full_spec(arr):
        nd = arr.ndim
        return pl.BlockSpec(arr.shape, lambda i, _nd=nd: (0,) * _nd)

    flops = 2 * n_pad * (INPUT_SIZE * HIDDEN
                         + (NUM_HIDDEN_LAYERS - 1) * HIDDEN * HIDDEN
                         + HIDDEN * NUM_OUTPUTS)
    bytes_accessed = 4 * (n_pad * INPUT_SIZE + n_pad * OUT_PAD
                          + w0f.size + b0f.size + wmf.size + bmf.size
                          + wf_pad.size + bf_pad.size)

    out = pl.pallas_call(
        mlp_kernel,
        out_shape=jax.ShapeDtypeStruct((n_pad, OUT_PAD), jnp.float32),
        grid=grid,
        in_specs=[
            pl.BlockSpec((tb, INPUT_SIZE), lambda i: (i, 0)),   # x: batch-tiled
            full_spec(w0f), full_spec(b0f),                     # resident weights
            full_spec(wmf), full_spec(bmf),
            full_spec(wf_pad), full_spec(bf_pad),
        ],
        out_specs=pl.BlockSpec((tb, OUT_PAD), lambda i: (i, 0)),
        compiler_params=pltpu.CompilerParams(
            dimension_semantics=("parallel",),       # megacore-shard batch tiles
            vmem_limit_bytes=32 * 1024 * 1024,
        ),
        cost_estimate=pl.CostEstimate(
            flops=flops, transcendentals=0, bytes_accessed=bytes_accessed),
    )(x, w0f, b0f, wmf, bmf, wf_pad, bf_pad)

    return out[:n, :NUM_OUTPUTS]


def neural_network_reference(x, params):
    """Pure-JAX reference of the eval-mode PyTorch forward."""
    sc0, sh0 = fold_bn(params["g0"], params["be0"], params["rm0"], params["rv0"])
    scm, shm = fold_bn(params["gm"], params["bem"], params["rmm"], params["rvm"])

    h = x @ params["w0"] + params["b0"]
    h = h * sc0 + sh0
    h = jnp.where(h >= 0, h, NEG_SLOPE * h)
    for i in range(NUM_HIDDEN_LAYERS - 1):
        h = h @ params["wm"][i] + params["bm"][i]
        h = h * scm[i] + shm[i]
        h = jnp.where(h >= 0, h, NEG_SLOPE * h)
    out = h @ params["wf"] + params["bf"]
    return jnp.where(out >= 0, out, NEG_SLOPE * out)


if __name__ == "__main__":
    key = jax.random.PRNGKey(0)
    k_params, k_x1, k_x2 = jax.random.split(key, 3)
    params = init_params(k_params)

    # small batch (single grid step, tb == 8)
    batch = 8
    x = jax.random.normal(k_x1, (batch, INPUT_SIZE), jnp.float32)
    out = jax.block_until_ready(neural_network_forward(x, params))
    ref = neural_network_reference(x, params)
    assert out.shape == (batch, NUM_OUTPUTS)
    assert jnp.allclose(out, ref, atol=1e-4, rtol=1e-4), "mismatch vs JAX reference (small)"

    # larger, non-multiple batch (exercises grid + padding path)
    batch2 = 520
    x2 = jax.random.normal(k_x2, (batch2, INPUT_SIZE), jnp.float32)
    out2 = jax.block_until_ready(neural_network_forward(x2, params))
    ref2 = neural_network_reference(x2, params)
    assert out2.shape == (batch2, NUM_OUTPUTS)
    assert jnp.allclose(out2, ref2, atol=1e-4, rtol=1e-4), "mismatch vs JAX reference (grid)"

    print("KERNEL_OK")
</pallas_src>

<mosaic_0001>
module attributes {stable_mosaic.version = 11 : i64} {
  func.func @mlp_kernel(%arg0: i32, %arg1: memref<8x3xf32, #tpu.memory_space<vmem>>, %arg2: memref<3x36xf32, #tpu.memory_space<vmem>>, %arg3: memref<1x36xf32, #tpu.memory_space<vmem>>, %arg4: memref<9x36x36xf32, #tpu.memory_space<vmem>>, %arg5: memref<9x1x36xf32, #tpu.memory_space<vmem>>, %arg6: memref<36x128xf32, #tpu.memory_space<vmem>>, %arg7: memref<1x128xf32, #tpu.memory_space<vmem>>, %arg8: memref<8x128xf32, #tpu.memory_space<vmem>>) attributes {dimension_semantics = [#tpu.dimension_semantics<parallel>], iteration_bounds = array<i64: 1>, scalar_prefetch = 0 : i64, scratch_operands = 0 : i64, tpu.core_type = #tpu.core_type<tc>, window_params = [{transform_indices = @transform_0, window_bounds = array<i64: 8, 3>}, {pipeline_mode = #tpu.pipeline_mode<synchronous>, transform_indices = @transform_1, window_bounds = array<i64: 3, 36>}, {pipeline_mode = #tpu.pipeline_mode<synchronous>, transform_indices = @transform_2, window_bounds = array<i64: 1, 36>}, {pipeline_mode = #tpu.pipeline_mode<synchronous>, transform_indices = @transform_3, window_bounds = array<i64: 9, 36, 36>}, {pipeline_mode = #tpu.pipeline_mode<synchronous>, transform_indices = @transform_4, window_bounds = array<i64: 9, 1, 36>}, {pipeline_mode = #tpu.pipeline_mode<synchronous>, transform_indices = @transform_5, window_bounds = array<i64: 36, 128>}, {pipeline_mode = #tpu.pipeline_mode<synchronous>, transform_indices = @transform_6, window_bounds = array<i64: 1, 128>}, {transform_indices = @transform_7, window_bounds = array<i64: 8, 128>}]} {
    %c0 = arith.constant 0 : index
    %c0_0 = arith.constant 0 : index
    %0 = vector.load %arg1[%c0, %c0_0] : memref<8x3xf32, #tpu.memory_space<vmem>>, vector<8x3xf32>
    %c0_1 = arith.constant 0 : index
    %c0_2 = arith.constant 0 : index
    %1 = vector.load %arg2[%c0_1, %c0_2] : memref<3x36xf32, #tpu.memory_space<vmem>>, vector<3x36xf32>
    %cst = arith.constant dense<0.000000e+00> : vector<8x36xf32>
    %2 = tpu.matmul %0, %1, %cst {dimension_numbers = #tpu.dot_dimension_numbers<[1], [0], [0], [1], [0, 0, 1, 1], [], []>} : vector<8x3xf32>, vector<3x36xf32>, vector<8x36xf32> -> vector<8x36xf32>
    %c0_3 = arith.constant 0 : index
    %c0_4 = arith.constant 0 : index
    %3 = vector.load %arg3[%c0_3, %c0_4] : memref<1x36xf32, #tpu.memory_space<vmem>>, vector<1x36xf32>
    %4 = vector.broadcast %3 : vector<1x36xf32> to vector<8x36xf32>
    %5 = arith.addf %2, %4 : vector<8x36xf32>
    %cst_5 = arith.constant 0.000000e+00 : f32
    %6 = vector.broadcast %cst_5 : f32 to vector<8x36xf32>
    %7 = arith.cmpf oge, %5, %6 : vector<8x36xf32>
    %cst_6 = arith.constant 0.00999999977 : f32
    %8 = vector.broadcast %cst_6 : f32 to vector<8x36xf32>
    %9 = arith.mulf %8, %5 : vector<8x36xf32>
    %10 = arith.select %7, %5, %9 : vector<8x36xi1>, vector<8x36xf32>
    %c0_7 = arith.constant 0 : index
    %c0_8 = arith.constant 0 : index
    %c0_9 = arith.constant 0 : index
    %11 = vector.load %arg4[%c0_7, %c0_8, %c0_9] : memref<9x36x36xf32, #tpu.memory_space<vmem>>, vector<1x36x36xf32>
    %12 = vector.shape_cast %11 : vector<1x36x36xf32> to vector<36x36xf32>
    %cst_10 = arith.constant dense<0.000000e+00> : vector<8x36xf32>
    %13 = tpu.matmul %10, %12, %cst_10 {dimension_numbers = #tpu.dot_dimension_numbers<[1], [0], [0], [1], [0, 0, 1, 1], [], []>} : vector<8x36xf32>, vector<36x36xf32>, vector<8x36xf32> -> vector<8x36xf32>
    %c0_11 = arith.constant 0 : index
    %c0_12 = arith.constant 0 : index
    %c0_13 = arith.constant 0 : index
    %14 = vector.load %arg5[%c0_11, %c0_12, %c0_13] : memref<9x1x36xf32, #tpu.memory_space<vmem>>, vector<1x1x36xf32>
    %15 = vector.shape_cast %14 : vector<1x1x36xf32> to vector<1x36xf32>
    %16 = vector.broadcast %15 : vector<1x36xf32> to vector<8x36xf32>
    %17 = arith.addf %13, %16 : vector<8x36xf32>
    %cst_14 = arith.constant 0.000000e+00 : f32
    %18 = vector.broadcast %cst_14 : f32 to vector<8x36xf32>
    %19 = arith.cmpf oge, %17, %18 : vector<8x36xf32>
    %cst_15 = arith.constant 0.00999999977 : f32
    %20 = vector.broadcast %cst_15 : f32 to vector<8x36xf32>
    %21 = arith.mulf %20, %17 : vector<8x36xf32>
    %22 = arith.select %19, %17, %21 : vector<8x36xi1>, vector<8x36xf32>
    %c1 = arith.constant 1 : index
    %c0_16 = arith.constant 0 : index
    %c0_17 = arith.constant 0 : index
    %23 = vector.load %arg4[%c1, %c0_16, %c0_17] : memref<9x36x36xf32, #tpu.memory_space<vmem>>, vector<1x36x36xf32>
    %24 = vector.shape_cast %23 : vector<1x36x36xf32> to vector<36x36xf32>
    %cst_18 = arith.constant dense<0.000000e+00> : vector<8x36xf32>
    %25 = tpu.matmul %22, %24, %cst_18 {dimension_numbers = #tpu.dot_dimension_numbers<[1], [0], [0], [1], [0, 0, 1, 1], [], []>} : vector<8x36xf32>, vector<36x36xf32>, vector<8x36xf32> -> vector<8x36xf32>
    %c1_19 = arith.constant 1 : index
    %c0_20 = arith.constant 0 : index
    %c0_21 = arith.constant 0 : index
    %26 = vector.load %arg5[%c1_19, %c0_20, %c0_21] : memref<9x1x36xf32, #tpu.memory_space<vmem>>, vector<1x1x36xf32>
    %27 = vector.shape_cast %26 : vector<1x1x36xf32> to vector<1x36xf32>
    %28 = vector.broadcast %27 : vector<1x36xf32> to vector<8x36xf32>
    %29 = arith.addf %25, %28 : vector<8x36xf32>
    %cst_22 = arith.constant 0.000000e+00 : f32
    %30 = vector.broadcast %cst_22 : f32 to vector<8x36xf32>
    %31 = arith.cmpf oge, %29, %30 : vector<8x36xf32>
    %cst_23 = arith.constant 0.00999999977 : f32
    %32 = vector.broadcast %cst_23 : f32 to vector<8x36xf32>
    %33 = arith.mulf %32, %29 : vector<8x36xf32>
    %34 = arith.select %31, %29, %33 : vector<8x36xi1>, vector<8x36xf32>
    %c2 = arith.constant 2 : index
    %c0_24 = arith.constant 0 : index
    %c0_25 = arith.constant 0 : index
    %35 = vector.load %arg4[%c2, %c0_24, %c0_25] : memref<9x36x36xf32, #tpu.memory_space<vmem>>, vector<1x36x36xf32>
    %36 = vector.shape_cast %35 : vector<1x36x36xf32> to vector<36x36xf32>
    %cst_26 = arith.constant dense<0.000000e+00> : vector<8x36xf32>
    %37 = tpu.matmul %34, %36, %cst_26 {dimension_numbers = #tpu.dot_dimension_numbers<[1], [0], [0], [1], [0, 0, 1, 1], [], []>} : vector<8x36xf32>, vector<36x36xf32>, vector<8x36xf32> -> vector<8x36xf32>
    %c2_27 = arith.constant 2 : index
    %c0_28 = arith.constant 0 : index
    %c0_29 = arith.constant 0 : index
    %38 = vector.load %arg5[%c2_27, %c0_28, %c0_29] : memref<9x1x36xf32, #tpu.memory_space<vmem>>, vector<1x1x36xf32>
    %39 = vector.shape_cast %38 : vector<1x1x36xf32> to vector<1x36xf32>
    %40 = vector.broadcast %39 : vector<1x36xf32> to vector<8x36xf32>
    %41 = arith.addf %37, %40 : vector<8x36xf32>
    %cst_30 = arith.constant 0.000000e+00 : f32
    %42 = vector.broadcast %cst_30 : f32 to vector<8x36xf32>
    %43 = arith.cmpf oge, %41, %42 : vector<8x36xf32>
    %cst_31 = arith.constant 0.00999999977 : f32
    %44 = vector.broadcast %cst_31 : f32 to vector<8x36xf32>
    %45 = arith.mulf %44, %41 : vector<8x36xf32>
    %46 = arith.select %43, %41, %45 : vector<8x36xi1>, vector<8x36xf32>
    %c3 = arith.constant 3 : index
    %c0_32 = arith.constant 0 : index
    %c0_33 = arith.constant 0 : index
    %47 = vector.load %arg4[%c3, %c0_32, %c0_33] : memref<9x36x36xf32, #tpu.memory_space<vmem>>, vector<1x36x36xf32>
    %48 = vector.shape_cast %47 : vector<1x36x36xf32> to vector<36x36xf32>
    %cst_34 = arith.constant dense<0.000000e+00> : vector<8x36xf32>
    %49 = tpu.matmul %46, %48, %cst_34 {dimension_numbers = #tpu.dot_dimension_numbers<[1], [0], [0], [1], [0, 0, 1, 1], [], []>} : vector<8x36xf32>, vector<36x36xf32>, vector<8x36xf32> -> vector<8x36xf32>
    %c3_35 = arith.constant 3 : index
    %c0_36 = arith.constant 0 : index
    %c0_37 = arith.constant 0 : index
    %50 = vector.load %arg5[%c3_35, %c0_36, %c0_37] : memref<9x1x36xf32, #tpu.memory_space<vmem>>, vector<1x1x36xf32>
    %51 = vector.shape_cast %50 : vector<1x1x36xf32> to vector<1x36xf32>
    %52 = vector.broadcast %51 : vector<1x36xf32> to vector<8x36xf32>
    %53 = arith.addf %49, %52 : vector<8x36xf32>
    %cst_38 = arith.constant 0.000000e+00 : f32
    %54 = vector.broadcast %cst_38 : f32 to vector<8x36xf32>
    %55 = arith.cmpf oge, %53, %54 : vector<8x36xf32>
    %cst_39 = arith.constant 0.00999999977 : f32
    %56 = vector.broadcast %cst_39 : f32 to vector<8x36xf32>
    %57 = arith.mulf %56, %53 : vector<8x36xf32>
    %58 = arith.select %55, %53, %57 : vector<8x36xi1>, vector<8x36xf32>
    %c4 = arith.constant 4 : index
    %c0_40 = arith.constant 0 : index
    %c0_41 = arith.constant 0 : index
    %59 = vector.load %arg4[%c4, %c0_40, %c0_41] : memref<9x36x36xf32, #tpu.memory_space<vmem>>, vector<1x36x36xf32>
    %60 = vector.shape_cast %59 : vector<1x36x36xf32> to vector<36x36xf32>
    %cst_42 = arith.constant dense<0.000000e+00> : vector<8x36xf32>
    %61 = tpu.matmul %58, %60, %cst_42 {dimension_numbers = #tpu.dot_dimension_numbers<[1], [0], [0], [1], [0, 0, 1, 1], [], []>} : vector<8x36xf32>, vector<36x36xf32>, vector<8x36xf32> -> vector<8x36xf32>
    %c4_43 = arith.constant 4 : index
    %c0_44 = arith.constant 0 : index
    %c0_45 = arith.constant 0 : index
    %62 = vector.load %arg5[%c4_43, %c0_44, %c0_45] : memref<9x1x36xf32, #tpu.memory_space<vmem>>, vector<1x1x36xf32>
    %63 = vector.shape_cast %62 : vector<1x1x36xf32> to vector<1x36xf32>
    %64 = vector.broadcast %63 : vector<1x36xf32> to vector<8x36xf32>
    %65 = arith.addf %61, %64 : vector<8x36xf32>
    %cst_46 = arith.constant 0.000000e+00 : f32
    %66 = vector.broadcast %cst_46 : f32 to vector<8x36xf32>
    %67 = arith.cmpf oge, %65, %66 : vector<8x36xf32>
    %cst_47 = arith.constant 0.00999999977 : f32
    %68 = vector.broadcast %cst_47 : f32 to vector<8x36xf32>
    %69 = arith.mulf %68, %65 : vector<8x36xf32>
    %70 = arith.select %67, %65, %69 : vector<8x36xi1>, vector<8x36xf32>
    %c5 = arith.constant 5 : index
    %c0_48 = arith.constant 0 : index
    %c0_49 = arith.constant 0 : index
    %71 = vector.load %arg4[%c5, %c0_48, %c0_49] : memref<9x36x36xf32, #tpu.memory_space<vmem>>, vector<1x36x36xf32>
    %72 = vector.shape_cast %71 : vector<1x36x36xf32> to vector<36x36xf32>
    %cst_50 = arith.constant dense<0.000000e+00> : vector<8x36xf32>
    %73 = tpu.matmul %70, %72, %cst_50 {dimension_numbers = #tpu.dot_dimension_numbers<[1], [0], [0], [1], [0, 0, 1, 1], [], []>} : vector<8x36xf32>, vector<36x36xf32>, vector<8x36xf32> -> vector<8x36xf32>
    %c5_51 = arith.constant 5 : index
    %c0_52 = arith.constant 0 : index
    %c0_53 = arith.constant 0 : index
    %74 = vector.load %arg5[%c5_51, %c0_52, %c0_53] : memref<9x1x36xf32, #tpu.memory_space<vmem>>, vector<1x1x36xf32>
    %75 = vector.shape_cast %74 : vector<1x1x36xf32> to vector<1x36xf32>
    %76 = vector.broadcast %75 : vector<1x36xf32> to vector<8x36xf32>
    %77 = arith.addf %73, %76 : vector<8x36xf32>
    %cst_54 = arith.constant 0.000000e+00 : f32
    %78 = vector.broadcast %cst_54 : f32 to vector<8x36xf32>
    %79 = arith.cmpf oge, %77, %78 : vector<8x36xf32>
    %cst_55 = arith.constant 0.00999999977 : f32
    %80 = vector.broadcast %cst_55 : f32 to vector<8x36xf32>
    %81 = arith.mulf %80, %77 : vector<8x36xf32>
    %82 = arith.select %79, %77, %81 : vector<8x36xi1>, vector<8x36xf32>
    %c6 = arith.constant 6 : index
    %c0_56 = arith.constant 0 : index
    %c0_57 = arith.constant 0 : index
    %83 = vector.load %arg4[%c6, %c0_56, %c0_57] : memref<9x36x36xf32, #tpu.memory_space<vmem>>, vector<1x36x36xf32>
    %84 = vector.shape_cast %83 : vector<1x36x36xf32> to vector<36x36xf32>
    %cst_58 = arith.constant dense<0.000000e+00> : vector<8x36xf32>
    %85 = tpu.matmul %82, %84, %cst_58 {dimension_numbers = #tpu.dot_dimension_numbers<[1], [0], [0], [1], [0, 0, 1, 1], [], []>} : vector<8x36xf32>, vector<36x36xf32>, vector<8x36xf32> -> vector<8x36xf32>
    %c6_59 = arith.constant 6 : index
    %c0_60 = arith.constant 0 : index
    %c0_61 = arith.constant 0 : index
    %86 = vector.load %arg5[%c6_59, %c0_60, %c0_61] : memref<9x1x36xf32, #tpu.memory_space<vmem>>, vector<1x1x36xf32>
    %87 = vector.shape_cast %86 : vector<1x1x36xf32> to vector<1x36xf32>
    %88 = vector.broadcast %87 : vector<1x36xf32> to vector<8x36xf32>
    %89 = arith.addf %85, %88 : vector<8x36xf32>
    %cst_62 = arith.constant 0.000000e+00 : f32
    %90 = vector.broadcast %cst_62 : f32 to vector<8x36xf32>
    %91 = arith.cmpf oge, %89, %90 : vector<8x36xf32>
    %cst_63 = arith.constant 0.00999999977 : f32
    %92 = vector.broadcast %cst_63 : f32 to vector<8x36xf32>
    %93 = arith.mulf %92, %89 : vector<8x36xf32>
    %94 = arith.select %91, %89, %93 : vector<8x36xi1>, vector<8x36xf32>
    %c7 = arith.constant 7 : index
    %c0_64 = arith.constant 0 : index
    %c0_65 = arith.constant 0 : index
    %95 = vector.load %arg4[%c7, %c0_64, %c0_65] : memref<9x36x36xf32, #tpu.memory_space<vmem>>, vector<1x36x36xf32>
    %96 = vector.shape_cast %95 : vector<1x36x36xf32> to vector<36x36xf32>
    %cst_66 = arith.constant dense<0.000000e+00> : vector<8x36xf32>
    %97 = tpu.matmul %94, %96, %cst_66 {dimension_numbers = #tpu.dot_dimension_numbers<[1], [0], [0], [1], [0, 0, 1, 1], [], []>} : vector<8x36xf32>, vector<36x36xf32>, vector<8x36xf32> -> vector<8x36xf32>
    %c7_67 = arith.constant 7 : index
    %c0_68 = arith.constant 0 : index
    %c0_69 = arith.constant 0 : index
    %98 = vector.load %arg5[%c7_67, %c0_68, %c0_69] : memref<9x1x36xf32, #tpu.memory_space<vmem>>, vector<1x1x36xf32>
    %99 = vector.shape_cast %98 : vector<1x1x36xf32> to vector<1x36xf32>
    %100 = vector.broadcast %99 : vector<1x36xf32> to vector<8x36xf32>
    %101 = arith.addf %97, %100 : vector<8x36xf32>
    %cst_70 = arith.constant 0.000000e+00 : f32
    %102 = vector.broadcast %cst_70 : f32 to vector<8x36xf32>
    %103 = arith.cmpf oge, %101, %102 : vector<8x36xf32>
    %cst_71 = arith.constant 0.00999999977 : f32
    %104 = vector.broadcast %cst_71 : f32 to vector<8x36xf32>
    %105 = arith.mulf %104, %101 : vector<8x36xf32>
    %106 = arith.select %103, %101, %105 : vector<8x36xi1>, vector<8x36xf32>
    %c8 = arith.constant 8 : index
    %c0_72 = arith.constant 0 : index
    %c0_73 = arith.constant 0 : index
    %107 = vector.load %arg4[%c8, %c0_72, %c0_73] : memref<9x36x36xf32, #tpu.memory_space<vmem>>, vector<1x36x36xf32>
    %108 = vector.shape_cast %107 : vector<1x36x36xf32> to vector<36x36xf32>
    %cst_74 = arith.constant dense<0.000000e+00> : vector<8x36xf32>
    %109 = tpu.matmul %106, %108, %cst_74 {dimension_numbers = #tpu.dot_dimension_numbers<[1], [0], [0], [1], [0, 0, 1, 1], [], []>} : vector<8x36xf32>, vector<36x36xf32>, vector<8x36xf32> -> vector<8x36xf32>
    %c8_75 = arith.constant 8 : index
    %c0_76 = arith.constant 0 : index
    %c0_77 = arith.constant 0 : index
    %110 = vector.load %arg5[%c8_75, %c0_76, %c0_77] : memref<9x1x36xf32, #tpu.memory_space<vmem>>, vector<1x1x36xf32>
    %111 = vector.shape_cast %110 : vector<1x1x36xf32> to vector<1x36xf32>
    %112 = vector.broadcast %111 : vector<1x36xf32> to vector<8x36xf32>
    %113 = arith.addf %109, %112 : vector<8x36xf32>
    %cst_78 = arith.constant 0.000000e+00 : f32
    %114 = vector.broadcast %cst_78 : f32 to vector<8x36xf32>
    %115 = arith.cmpf oge, %113, %114 : vector<8x36xf32>
    %cst_79 = arith.constant 0.00999999977 : f32
    %116 = vector.broadcast %cst_79 : f32 to vector<8x36xf32>
    %117 = arith.mulf %116, %113 : vector<8x36xf32>
    %118 = arith.select %115, %113, %117 : vector<8x36xi1>, vector<8x36xf32>
    %c0_80 = arith.constant 0 : index
    %c0_81 = arith.constant 0 : index
    %119 = vector.load %arg6[%c0_80, %c0_81] : memref<36x128xf32, #tpu.memory_space<vmem>>, vector<36x128xf32>
    %cst_82 = arith.constant dense<0.000000e+00> : vector<8x128xf32>
    %120 = tpu.matmul %118, %119, %cst_82 {dimension_numbers = #tpu.dot_dimension_numbers<[1], [0], [0], [1], [0, 0, 1, 1], [], []>} : vector<8x36xf32>, vector<36x128xf32>, vector<8x128xf32> -> vector<8x128xf32>
    %c0_83 = arith.constant 0 : index
    %c0_84 = arith.constant 0 : index
    %121 = vector.load %arg7[%c0_83, %c0_84] : memref<1x128xf32, #tpu.memory_space<vmem>>, vector<1x128xf32>
    %122 = vector.broadcast %121 : vector<1x128xf32> to vector<8x128xf32>
    %123 = arith.addf %120, %122 : vector<8x128xf32>
    %cst_85 = arith.constant 0.000000e+00 : f32
    %124 = vector.broadcast %cst_85 : f32 to vector<8x128xf32>
    %125 = arith.cmpf oge, %123, %124 : vector<8x128xf32>
    %cst_86 = arith.constant 0.00999999977 : f32
    %126 = vector.broadcast %cst_86 : f32 to vector<8x128xf32>
    %127 = arith.mulf %126, %123 : vector<8x128xf32>
    %128 = arith.select %125, %123, %127 : vector<8x128xi1>, vector<8x128xf32>
    %c0_87 = arith.constant 0 : index
    %c0_88 = arith.constant 0 : index
    %129 = vector.load %arg8[%c0_87, %c0_88] : memref<8x128xf32, #tpu.memory_space<vmem>>, vector<8x128xf32>
    tpu.vector_store %arg8[%c0_87, %c0_88], %128 {strides = array<i32>} : memref<8x128xf32, #tpu.memory_space<vmem>>, vector<8x128xf32>,
    return
  }
  func.func @transform_0(%arg0: i32) -> (i32, i32) {
    %c0_i32 = arith.constant 0 : i32
    %c0_i32_0 = arith.constant 0 : i32
    return %arg0, %c0_i32 : i32, i32
  }
  func.func @transform_1(%arg0: i32) -> (i32, i32) {
    %c0_i32 = arith.constant 0 : i32
    %c0_i32_0 = arith.constant 0 : i32
    %c0_i32_1 = arith.constant 0 : i32
    return %c0_i32, %c0_i32_0 : i32, i32
  }
  func.func @transform_2(%arg0: i32) -> (i32, i32) {
    %c0_i32 = arith.constant 0 : i32
    %c0_i32_0 = arith.constant 0 : i32
    %c0_i32_1 = arith.constant 0 : i32
    return %c0_i32, %c0_i32_0 : i32, i32
  }
  func.func @transform_3(%arg0: i32) -> (i32, i32, i32) {
    %c0_i32 = arith.constant 0 : i32
    %c0_i32_0 = arith.constant 0 : i32
    %c0_i32_1 = arith.constant 0 : i32
    %c0_i32_2 = arith.constant 0 : i32
    return %c0_i32, %c0_i32_0, %c0_i32_1 : i32, i32, i32
  }
  func.func @transform_4(%arg0: i32) -> (i32, i32, i32) {
    %c0_i32 = arith.constant 0 : i32
    %c0_i32_0 = arith.constant 0 : i32
    %c0_i32_1 = arith.constant 0 : i32
    %c0_i32_2 = arith.constant 0 : i32
    return %c0_i32, %c0_i32_0, %c0_i32_1 : i32, i32, i32
  }
  func.func @transform_5(%arg0: i32) -> (i32, i32) {
    %c0_i32 = arith.constant 0 : i32
    %c0_i32_0 = arith.constant 0 : i32
    %c0_i32_1 = arith.constant 0 : i32
    return %c0_i32, %c0_i32_0 : i32, i32
  }
  func.func @transform_6(%arg0: i32) -> (i32, i32) {
    %c0_i32 = arith.constant 0 : i32
    %c0_i32_0 = arith.constant 0 : i32
    %c0_i32_1 = arith.constant 0 : i32
    return %c0_i32, %c0_i32_0 : i32, i32
  }
  func.func @transform_7(%arg0: i32) -> (i32, i32) {
    %c0_i32 = arith.constant 0 : i32
    %c0_i32_0 = arith.constant 0 : i32
    return %arg0, %c0_i32 : i32, i32
  }
}

</mosaic_0001>

<llo_original>
// kernel: tpu_custom_call.1
$region0: #{tpu_custom_call.1}
  #allocation0 [shape = 'u32[]', space=smem, size = 0x4, offset = 0x4, fixed_abs, tag = 'smem constant byte address 0x4 - core index']
  #allocation1 [shape = 'u32[144,128]{1,0:T(1,128)}', space=vmem, size = 0x12000, scoped, tag = 'internal scratch']
  %s0 = inlined_call_operand.vmem [shape: f32[8,3], index: 0, kind: input, shape index: {}]
  %s1 = inlined_call_operand.vmem [shape: f32[3,36], index: 1, kind: input, shape index: {}]
  %s2 = inlined_call_operand.vmem [shape: f32[1,36], index: 2, kind: input, shape index: {}]
  %s3 = inlined_call_operand.hbm [shape: f32[9,36,36], index: 3, kind: input, shape index: {}]
  %s4 = inlined_call_operand.vmem [shape: f32[9,1,36], index: 4, kind: input, shape index: {}]
  %s5 = inlined_call_operand.hbm [shape: f32[36,128], index: 5, kind: input, shape index: {}]
  %s6 = inlined_call_operand.vmem [shape: f32[1,128], index: 6, kind: input, shape index: {}]
  %s7 = inlined_call_operand.hbm [shape: f32[8,128], index: 7, kind: output, shape index: {}]
  %s8 = sld [smem:[#allocation0]]
  $region46: #{tpu_custom_call.1} parent=0
    _
  %s10 = ssub.s32 1, %s8
  %s11 = scalar_select 0, %s10, %s8
  $region1: #{tpu_custom_call.1} parent=0
    #allocation2 [shape = 'u8[184320]{0}', space=vmem, size = 0x2d000, scoped, tag = 'input window, operand 3, single buffered']
    #allocation3 [shape = 's32[1]{0}', space=sflag, size = 0x4, scoped, tag = 'scoped memory for tpu_custom_call.1']
    #allocation4 [shape = 's32[1]{0}', space=sflag, size = 0x4, scoped, tag = 'scoped memory for tpu_custom_call.1']
    #allocation5 [shape = 'u8[20480]{0}', space=vmem, size = 0x5000, scoped, tag = 'input window, operand 5, single buffered']
    #allocation6 [shape = 's32[1]{0}', space=sflag, size = 0x4, scoped, tag = 'scoped memory for tpu_custom_call.1']
    #allocation7 [shape = 'u8[4096]{0}', space=vmem, size = 0x1000, scoped, tag = 'output window, operand 0, single buffered']
    %12 = vsyncpa [#allocation3], 0
    %13 = vsyncpa [#allocation6], 0
    %14 = vsyncpa [#allocation4], 0
    // Predicated region
    $region2: #{tpu_custom_call.1} parent=1 // pred_check
      _
    $region3: #{tpu_custom_call.1} parent=1 // pred_check_branch
      %16 = sbr.rel (0) target = $region5
    $region4: #{tpu_custom_call.1} parent=1 // pred_region
      _
    $region5: #{tpu_custom_call.1} parent=1 // pred_fallthru
      _
    // Predicated region
    $region6: #{tpu_custom_call.1} parent=1 // pred_check
      _
    $region7: #{tpu_custom_call.1} parent=1 // pred_check_branch
      %18 = sbr.rel (0) target = $region9
    $region8: #{tpu_custom_call.1} parent=1 // pred_region
      _
    $region9: #{tpu_custom_call.1} parent=1 // pred_fallthru
      _
    // Predicated region
    $region10: #{tpu_custom_call.1} parent=1 // pred_check
      _
    $region11: #{tpu_custom_call.1} parent=1 // pred_check_branch
      %20 = sbr.rel (0) target = $region13
    $region12: #{tpu_custom_call.1} parent=1 // pred_region
      _
    $region13: #{tpu_custom_call.1} parent=1 // pred_fallthru
      _
    // Predicated region
    $region14: #{tpu_custom_call.1} parent=1 // pred_check
      _
    $region15: #{tpu_custom_call.1} parent=1 // pred_check_branch
      %22 = sbr.rel (0) target = $region17
    $region16: #{tpu_custom_call.1} parent=1 // pred_region
      %s24 = ssub.s32 5760, 5760
      %25 = vsyncadd [#allocation3], %s24
      %s26 = sshll.u32 [#allocation2], 4
      %s27 = int_to_ptr.vmem [resolvable:$true] %s26
      %32 = dma.hbm_to_vmem [thread:$0]  %s3, 5760, %s27, [#allocation3], 128, 128, 8
    $region17: #{tpu_custom_call.1} parent=1 // pred_fallthru
      _
    // Predicated region
    $region18: #{tpu_custom_call.1} parent=1 // pred_check
      _
    $region19: #{tpu_custom_call.1} parent=1 // pred_check_branch
      %34 = sbr.rel (0) target = $region21
    $region20: #{tpu_custom_call.1} parent=1 // pred_region
      _
    $region21: #{tpu_custom_call.1} parent=1 // pred_fallthru
      _
    // Predicated region
    $region22: #{tpu_custom_call.1} parent=1 // pred_check
      _
    $region23: #{tpu_custom_call.1} parent=1 // pred_check_branch
      %36 = sbr.rel (0) target = $region25
    $region24: #{tpu_custom_call.1} parent=1 // pred_region
      %s38 = ssub.s32 640, 640
      %39 = vsyncadd [#allocation6], %s38
      %s40 = sshll.u32 [#allocation5], 4
      %s41 = int_to_ptr.vmem [resolvable:$true] %s40
      %46 = dma.hbm_to_vmem [thread:$0]  %s5, 640, %s41, [#allocation6], 128, 128, 8
    $region25: #{tpu_custom_call.1} parent=1 // pred_fallthru
      _
    // Predicated region
    $region26: #{tpu_custom_call.1} parent=1 // pred_check
      _
    $region27: #{tpu_custom_call.1} parent=1 // pred_check_branch
      %48 = sbr.rel (0) target = $region29
    $region28: #{tpu_custom_call.1} parent=1 // pred_region
      _
    $region29: #{tpu_custom_call.1} parent=1 // pred_fallthru
      _
    // Predicated region
    $region30: #{tpu_custom_call.1} parent=1 // pred_check
      _
    $region31: #{tpu_custom_call.1} parent=1 // pred_check_branch
      %50 = sbr.rel (0) target = $region33
    $region32: #{tpu_custom_call.1} parent=1 // pred_region
      %51 = dma.done [#allocation3], 5760
    $region33: #{tpu_custom_call.1} parent=1 // pred_fallthru
      _
    // Predicated region
    $region34: #{tpu_custom_call.1} parent=1 // pred_check
      _
    $region35: #{tpu_custom_call.1} parent=1 // pred_check_branch
      %53 = sbr.rel (0) target = $region37
    $region36: #{tpu_custom_call.1} parent=1 // pred_region
      %54 = dma.done [#allocation6], 640
    $region37: #{tpu_custom_call.1} parent=1 // pred_fallthru
      _
    %v55 = vld [vmem:[%s0] sm:$0xff]
    %v56 = vld [vmem:[%s1] sm:$0x7]
    %v57 = vld [vmem:[%s2] sm:$0x1]
    %v59 = vlaneseq
    %v60 = vshrl.u32 %v59, 7
    %v61 = vsub.s32 0, %v60
    %v62 = vrot.slane %v57, %v61
    %vm64 = vcmask 23552
    %v66 = vsel %vm64, %v55, 0
    %vm68 = vcmask 1042432
    %v70 = vsel %vm68, %v56, 0
    %72 = vmatprep.subr.mxu0 0.0
    %73 = vmatpush1.msra.mxu0 0.0
    %74 = vmatprep.subr.mxu0 0.0
    %75 = vmatpush1.msra.mxu0 0.0
    %76 = vmatprep.subr.mxu0 0.0
    %77 = vmatpush1.msra.mxu0 0.0
    %78 = vmatprep.subr.mxu0 0.0
    %79 = vmatpush1.msra.mxu0 0.0
    %80 = vmatprep.subr.mxu0 0.0
    %81 = vmatpush1.msra.mxu0 0.0
    %82 = vmatprep.subr.mxu0 0.0
    %83 = vmatpush1.msra.mxu0 0.0
    %84 = vmatprep.subr.mxu0 0.0
    %85 = vmatpush1.msra.mxu0 0.0
    %86 = vmatprep.subr.mxu0 0.0
    %87 = vmatpush1.msra.mxu0 0.0
    %88 = vmatprep.subr.mxu0 0.0
    %89 = vmatpush1.msra.mxu0 0.0
    %90 = vmatprep.subr.mxu0 0.0
    %91 = vmatpush1.msra.mxu0 0.0
    %92 = vmatprep.subr.mxu0 0.0
    %93 = vmatpush1.msra.mxu0 0.0
    %94 = vmatprep.subr.mxu0 0.0
    %95 = vmatpush1.msra.mxu0 0.0
    %96 = vmatprep.subr.mxu0 0.0
    %97 = vmatpush1.msra.mxu0 0.0
    %98 = vmatprep.subr.mxu0 0.0
    %99 = vmatpush1.msra.mxu0 0.0
    %100 = vmatprep.subr.mxu0 0.0
    %101 = vmatpush1.msra.mxu0 0.0
    %102 = vmatprep.subr.mxu0 0.0
    %103 = vmatpush1.msra.mxu0 %v70
    %104 = vmatprep.subr.mxu0 0.0
    %105 = vmatpush2.msra.mxu0 0.0
    %106 = vmatprep.subr.mxu0 0.0
    %107 = vmatpush2.msra.mxu0 0.0
    %108 = vmatprep.subr.mxu0 0.0
    %109 = vmatpush2.msra.mxu0 0.0
    %110 = vmatprep.subr.mxu0 0.0
    %111 = vmatpush2.msra.mxu0 0.0
    %112 = vmatprep.subr.mxu0 0.0
    %113 = vmatpush2.msra.mxu0 0.0
    %114 = vmatprep.subr.mxu0 0.0
    %115 = vmatpush2.msra.mxu0 0.0
    %116 = vmatprep.subr.mxu0 0.0
    %117 = vmatpush2.msra.mxu0 0.0
    %118 = vmatprep.subr.mxu0 0.0
    %119 = vmatpush2.msra.mxu0 0.0
    %120 = vmatprep.subr.mxu0 0.0
    %121 = vmatpush2.msra.mxu0 0.0
    %122 = vmatprep.subr.mxu0 0.0
    %123 = vmatpush2.msra.mxu0 0.0
    %124 = vmatprep.subr.mxu0 0.0
    %125 = vmatpush2.msra.mxu0 0.0
    %126 = vmatprep.subr.mxu0 0.0
    %127 = vmatpush2.msra.mxu0 0.0
    %128 = vmatprep.subr.mxu0 0.0
    %129 = vmatpush2.msra.mxu0 0.0
    %130 = vmatprep.subr.mxu0 0.0
    %131 = vmatpush2.msra.mxu0 0.0
    %132 = vmatprep.subr.mxu0 0.0
    %133 = vmatpush2.msra.mxu0 0.0
    %134 = vmatprep.subr.mxu0 0.0
    %135 = vmatpush2.msra.mxu0 0.0
    %136 = vmatprep.mubr.f32.mxu0 0.0
    %137 = vmatmul.mubr.f32.gmra.mxu0 %v66
    %v138 = vpop.f32.mrf.mxu0
    %v139 = vadd.f32 %v62, %v138
    %v140 = vpop.f32.mrf.mxu0
    %141 = vdwg.mxu0
    %vm142 = vcmp.ge.f32.partialorder %v139, 0.0
    %v143 = vmul.f32 %v139, 0.01
    %v144 = vsel %vm142, %v139, %v143
    %v145 = vld [vmem:[#allocation2] sm:$0xff]
    %v146 = vld [vmem:[#allocation2 + $0x8] sm:$0xff]
    %v147 = vld [vmem:[#allocation2 + $0x10] sm:$0xff]
    %v148 = vld [vmem:[#allocation2 + $0x18] sm:$0xff]
    %v149 = vld [vmem:[#allocation2 + $0x20] sm:$0xf]
    %v150 = vld [vmem:[%s4] sm:$0x1]
    %v152 = vlaneseq
    %v153 = vshrl.u32 %v152, 7
    %v154 = vsub.s32 0, %v153
    %v155 = vrot.slane %v150, %v154
    %vm157 = vcmask 293888
    %v159 = vsel %vm157, %v144, 0
    %vm161 = vcmask 1043456
    %v163 = vsel %vm161, %v149, 0
    %165 = vmatprep.subr.mxu0 0.0
    %166 = vmatpush1.msra.mxu0 0.0
    %167 = vmatprep.subr.mxu0 0.0
    %168 = vmatpush1.msra.mxu0 0.0
    %169 = vmatprep.subr.mxu0 0.0
    %170 = vmatpush1.msra.mxu0 0.0
    %171 = vmatprep.subr.mxu0 0.0
    %172 = vmatpush1.msra.mxu0 0.0
    %173 = vmatprep.subr.mxu0 0.0
    %174 = vmatpush1.msra.mxu0 0.0
    %175 = vmatprep.subr.mxu0 0.0
    %176 = vmatpush1.msra.mxu0 0.0
    %177 = vmatprep.subr.mxu0 0.0
    %178 = vmatpush1.msra.mxu0 0.0
    %179 = vmatprep.subr.mxu0 0.0
    %180 = vmatpush1.msra.mxu0 0.0
    %181 = vmatprep.subr.mxu0 0.0
    %182 = vmatpush1.msra.mxu0 0.0
    %183 = vmatprep.subr.mxu0 0.0
    %184 = vmatpush1.msra.mxu0 0.0
    %185 = vmatprep.subr.mxu0 0.0
    %186 = vmatpush1.msra.mxu0 0.0
    %187 = vmatprep.subr.mxu0 0.0
    %188 = vmatpush1.msra.mxu0 %v163
    %189 = vmatprep.subr.mxu0 0.0
    %190 = vmatpush1.msra.mxu0 %v148
    %191 = vmatprep.subr.mxu0 0.0
    %192 = vmatpush1.msra.mxu0 %v147
    %193 = vmatprep.subr.mxu0 0.0
    %194 = vmatpush1.msra.mxu0 %v146
    %195 = vmatprep.subr.mxu0 0.0
    %196 = vmatpush1.msra.mxu0 %v145
    %197 = vmatprep.subr.mxu0 0.0
    %198 = vmatpush2.msra.mxu0 0.0
    %199 = vmatprep.subr.mxu0 0.0
    %200 = vmatpush2.msra.mxu0 0.0
    %201 = vmatprep.subr.mxu0 0.0
    %202 = vmatpush2.msra.mxu0 0.0
    %203 = vmatprep.subr.mxu0 0.0
    %204 = vmatpush2.msra.mxu0 0.0
    %205 = vmatprep.subr.mxu0 0.0
    %206 = vmatpush2.msra.mxu0 0.0
    %207 = vmatprep.subr.mxu0 0.0
    %208 = vmatpush2.msra.mxu0 0.0
    %209 = vmatprep.subr.mxu0 0.0
    %210 = vmatpush2.msra.mxu0 0.0
    %211 = vmatprep.subr.mxu0 0.0
    %212 = vmatpush2.msra.mxu0 0.0
    %213 = vmatprep.subr.mxu0 0.0
    %214 = vmatpush2.msra.mxu0 0.0
    %215 = vmatprep.subr.mxu0 0.0
    %216 = vmatpush2.msra.mxu0 0.0
    %217 = vmatprep.subr.mxu0 0.0
    %218 = vmatpush2.msra.mxu0 0.0
    %219 = vmatprep.subr.mxu0 0.0
    %220 = vmatpush2.msra.mxu0 0.0
    %221 = vmatprep.subr.mxu0 0.0
    %222 = vmatpush2.msra.mxu0 0.0
    %223 = vmatprep.subr.mxu0 0.0
    %224 = vmatpush2.msra.mxu0 0.0
    %225 = vmatprep.subr.mxu0 0.0
    %226 = vmatpush2.msra.mxu0 0.0
    %227 = vmatprep.subr.mxu0 0.0
    %228 = vmatpush2.msra.mxu0 0.0
    %229 = vmatprep.mubr.f32.mxu0 0.0
    %230 = vmatmul.mubr.f32.gmra.mxu0 %v159
    %v231 = vpop.f32.mrf.mxu0
    %v232 = vadd.f32 %v155, %v231
    %v233 = vpop.f32.mrf.mxu0
    %234 = vdwg.mxu0
    %vm235 = vcmp.ge.f32.partialorder %v232, 0.0
    %v236 = vmul.f32 %v232, 0.01
    %v237 = vsel %vm235, %v232, %v236
    %s238 = scalar_lea.vmem [#allocation2], 40
    %v239 = vld [vmem:[%s238] sm:$0xff]
    %v240 = vld [vmem:[%s238 + $0x8] sm:$0xff]
    %v241 = vld [vmem:[%s238 + $0x10] sm:$0xff]
    %v242 = vld [vmem:[%s238 + $0x18] sm:$0xff]
    %v243 = vld [vmem:[%s238 + $0x20] sm:$0xf]
    %s244 = scalar_lea.vmem %s4, 1
    %v245 = vld [vmem:[%s244] sm:$0x1]
    %v247 = vlaneseq
    %v248 = vshrl.u32 %v247, 7
    %v249 = vsub.s32 0, %v248
    %v250 = vrot.slane %v245, %v249
    %v253 = vsel %vm157, %v237, 0
    %v256 = vsel %vm161, %v243, 0
    %258 = vmatprep.subr.mxu0 0.0
    %259 = vmatpush1.msra.mxu0 0.0
    %260 = vmatprep.subr.mxu0 0.0
    %261 = vmatpush1.msra.mxu0 0.0
    %262 = vmatprep.subr.mxu0 0.0
    %263 = vmatpush1.msra.mxu0 0.0
    %264 = vmatprep.subr.mxu0 0.0
    %265 = vmatpush1.msra.mxu0 0.0
    %266 = vmatprep.subr.mxu0 0.0
    %267 = vmatpush1.msra.mxu0 0.0
    %268 = vmatprep.subr.mxu0 0.0
    %269 = vmatpush1.msra.mxu0 0.0
    %270 = vmatprep.subr.mxu0 0.0
    %271 = vmatpush1.msra.mxu0 0.0
    %272 = vmatprep.subr.mxu0 0.0
    %273 = vmatpush1.msra.mxu0 0.0
    %274 = vmatprep.subr.mxu0 0.0
    %275 = vmatpush1.msra.mxu0 0.0
    %276 = vmatprep.subr.mxu0 0.0
    %277 = vmatpush1.msra.mxu0 0.0
    %278 = vmatprep.subr.mxu0 0.0
    %279 = vmatpush1.msra.mxu0 0.0
    %280 = vmatprep.subr.mxu0 0.0
    %281 = vmatpush1.msra.mxu0 %v256
    %282 = vmatprep.subr.mxu0 0.0
    %283 = vmatpush1.msra.mxu0 %v242
    %284 = vmatprep.subr.mxu0 0.0
    %285 = vmatpush1.msra.mxu0 %v241
    %286 = vmatprep.subr.mxu0 0.0
    %287 = vmatpush1.msra.mxu0 %v240
    %288 = vmatprep.subr.mxu0 0.0
    %289 = vmatpush1.msra.mxu0 %v239
    %290 = vmatprep.subr.mxu0 0.0
    %291 = vmatpush2.msra.mxu0 0.0
    %292 = vmatprep.subr.mxu0 0.0
    %293 = vmatpush2.msra.mxu0 0.0
    %294 = vmatprep.subr.mxu0 0.0
    %295 = vmatpush2.msra.mxu0 0.0
    %296 = vmatprep.subr.mxu0 0.0
    %297 = vmatpush2.msra.mxu0 0.0
    %298 = vmatprep.subr.mxu0 0.0
    %299 = vmatpush2.msra.mxu0 0.0
    %300 = vmatprep.subr.mxu0 0.0
    %301 = vmatpush2.msra.mxu0 0.0
    %302 = vmatprep.subr.mxu0 0.0
    %303 = vmatpush2.msra.mxu0 0.0
    %304 = vmatprep.subr.mxu0 0.0
    %305 = vmatpush2.msra.mxu0 0.0
    %306 = vmatprep.subr.mxu0 0.0
    %307 = vmatpush2.msra.mxu0 0.0
    %308 = vmatprep.subr.mxu0 0.0
    %309 = vmatpush2.msra.mxu0 0.0
    %310 = vmatprep.subr.mxu0 0.0
    %311 = vmatpush2.msra.mxu0 0.0
    %312 = vmatprep.subr.mxu0 0.0
    %313 = vmatpush2.msra.mxu0 0.0
    %314 = vmatprep.subr.mxu0 0.0
    %315 = vmatpush2.msra.mxu0 0.0
    %316 = vmatprep.subr.mxu0 0.0
    %317 = vmatpush2.msra.mxu0 0.0
    %318 = vmatprep.subr.mxu0 0.0
    %319 = vmatpush2.msra.mxu0 0.0
    %320 = vmatprep.subr.mxu0 0.0
    %321 = vmatpush2.msra.mxu0 0.0
    %322 = vmatprep.mubr.f32.mxu0 0.0
    %323 = vmatmul.mubr.f32.gmra.mxu0 %v253
    %v324 = vpop.f32.mrf.mxu0
    %v325 = vadd.f32 %v250, %v324
    %v326 = vpop.f32.mrf.mxu0
    %327 = vdwg.mxu0
    %vm328 = vcmp.ge.f32.partialorder %v325, 0.0
    %v329 = vmul.f32 %v325, 0.01
    %v330 = vsel %vm328, %v325, %v329
    %s331 = scalar_lea.vmem [#allocation2], 80
    %v332 = vld [vmem:[%s331] sm:$0xff]
    %v333 = vld [vmem:[%s331 + $0x8] sm:$0xff]
    %v334 = vld [vmem:[%s331 + $0x10] sm:$0xff]
    %v335 = vld [vmem:[%s331 + $0x18] sm:$0xff]
    %v336 = vld [vmem:[%s331 + $0x20] sm:$0xf]
    %s337 = scalar_lea.vmem %s4, 2
    %v338 = vld [vmem:[%s337] sm:$0x1]
    %v340 = vlaneseq
    %v341 = vshrl.u32 %v340, 7
    %v342 = vsub.s32 0, %v341
    %v343 = vrot.slane %v338, %v342
    %v346 = vsel %vm157, %v330, 0
    %v349 = vsel %vm161, %v336, 0
    %351 = vmatprep.subr.mxu0 0.0
    %352 = vmatpush1.msra.mxu0 0.0
    %353 = vmatprep.subr.mxu0 0.0
    %354 = vmatpush1.msra.mxu0 0.0
    %355 = vmatprep.subr.mxu0 0.0
    %356 = vmatpush1.msra.mxu0 0.0
    %357 = vmatprep.subr.mxu0 0.0
    %358 = vmatpush1.msra.mxu0 0.0
    %359 = vmatprep.subr.mxu0 0.0
    %360 = vmatpush1.msra.mxu0 0.0
    %361 = vmatprep.subr.mxu0 0.0
    %362 = vmatpush1.msra.mxu0 0.0
    %363 = vmatprep.subr.mxu0 0.0
    %364 = vmatpush1.msra.mxu0 0.0
    %365 = vmatprep.subr.mxu0 0.0
    %366 = vmatpush1.msra.mxu0 0.0
    %367 = vmatprep.subr.mxu0 0.0
    %368 = vmatpush1.msra.mxu0 0.0
    %369 = vmatprep.subr.mxu0 0.0
    %370 = vmatpush1.msra.mxu0 0.0
    %371 = vmatprep.subr.mxu0 0.0
    %372 = vmatpush1.msra.mxu0 0.0
    %373 = vmatprep.subr.mxu0 0.0
    %374 = vmatpush1.msra.mxu0 %v349
    %375 = vmatprep.subr.mxu0 0.0
    %376 = vmatpush1.msra.mxu0 %v335
    %377 = vmatprep.subr.mxu0 0.0
    %378 = vmatpush1.msra.mxu0 %v334
    %379 = vmatprep.subr.mxu0 0.0
    %380 = vmatpush1.msra.mxu0 %v333
    %381 = vmatprep.subr.mxu0 0.0
    %382 = vmatpush1.msra.mxu0 %v332
    %383 = vmatprep.subr.mxu0 0.0
    %384 = vmatpush2.msra.mxu0 0.0
    %385 = vmatprep.subr.mxu0 0.0
    %386 = vmatpush2.msra.mxu0 0.0
    %387 = vmatprep.subr.mxu0 0.0
    %388 = vmatpush2.msra.mxu0 0.0
    %389 = vmatprep.subr.mxu0 0.0
    %390 = vmatpush2.msra.mxu0 0.0
    %391 = vmatprep.subr.mxu0 0.0
    %392 = vmatpush2.msra.mxu0 0.0
    %393 = vmatprep.subr.mxu0 0.0
    %394 = vmatpush2.msra.mxu0 0.0
    %395 = vmatprep.subr.mxu0 0.0
    %396 = vmatpush2.msra.mxu0 0.0
    %397 = vmatprep.subr.mxu0 0.0
    %398 = vmatpush2.msra.mxu0 0.0
    %399 = vmatprep.subr.mxu0 0.0
    %400 = vmatpush2.msra.mxu0 0.0
    %401 = vmatprep.subr.mxu0 0.0
    %402 = vmatpush2.msra.mxu0 0.0
    %403 = vmatprep.subr.mxu0 0.0
    %404 = vmatpush2.msra.mxu0 0.0
    %405 = vmatprep.subr.mxu0 0.0
    %406 = vmatpush2.msra.mxu0 0.0
    %407 = vmatprep.subr.mxu0 0.0
    %408 = vmatpush2.msra.mxu0 0.0
    %409 = vmatprep.subr.mxu0 0.0
    %410 = vmatpush2.msra.mxu0 0.0
    %411 = vmatprep.subr.mxu0 0.0
    %412 = vmatpush2.msra.mxu0 0.0
    %413 = vmatprep.subr.mxu0 0.0
    %414 = vmatpush2.msra.mxu0 0.0
    %415 = vmatprep.mubr.f32.mxu0 0.0
    %416 = vmatmul.mubr.f32.gmra.mxu0 %v346
    %v417 = vpop.f32.mrf.mxu0
    %v418 = vadd.f32 %v343, %v417
    %v419 = vpop.f32.mrf.mxu0
    %420 = vdwg.mxu0
    %vm421 = vcmp.ge.f32.partialorder %v418, 0.0
    %v422 = vmul.f32 %v418, 0.01
    %v423 = vsel %vm421, %v418, %v422
    %s424 = scalar_lea.vmem [#allocation2], 120
    %v425 = vld [vmem:[%s424] sm:$0xff]
    %v426 = vld [vmem:[%s424 + $0x8] sm:$0xff]
    %v427 = vld [vmem:[%s424 + $0x10] sm:$0xff]
    %v428 = vld [vmem:[%s424 + $0x18] sm:$0xff]
    %v429 = vld [vmem:[%s424 + $0x20] sm:$0xf]
    %s430 = scalar_lea.vmem %s4, 3
    %v431 = vld [vmem:[%s430] sm:$0x1]
    %v433 = vlaneseq
    %v434 = vshrl.u32 %v433, 7
    %v435 = vsub.s32 0, %v434
    %v436 = vrot.slane %v431, %v435
    %v439 = vsel %vm157, %v423, 0
    %v442 = vsel %vm161, %v429, 0
    %444 = vmatprep.subr.mxu0 0.0
    %445 = vmatpush1.msra.mxu0 0.0
    %446 = vmatprep.subr.mxu0 0.0
    %447 = vmatpush1.msra.mxu0 0.0
    %448 = vmatprep.subr.mxu0 0.0
    %449 = vmatpush1.msra.mxu0 0.0
    %450 = vmatprep.subr.mxu0 0.0
    %451 = vmatpush1.msra.mxu0 0.0
    %452 = vmatprep.subr.mxu0 0.0
    %453 = vmatpush1.msra.mxu0 0.0
    %454 = vmatprep.subr.mxu0 0.0
    %455 = vmatpush1.msra.mxu0 0.0
    %456 = vmatprep.subr.mxu0 0.0
    %457 = vmatpush1.msra.mxu0 0.0
    %458 = vmatprep.subr.mxu0 0.0
    %459 = vmatpush1.msra.mxu0 0.0
    %460 = vmatprep.subr.mxu0 0.0
    %461 = vmatpush1.msra.mxu0 0.0
    %462 = vmatprep.subr.mxu0 0.0
    %463 = vmatpush1.msra.mxu0 0.0
    %464 = vmatprep.subr.mxu0 0.0
    %465 = vmatpush1.msra.mxu0 0.0
    %466 = vmatprep.subr.mxu0 0.0
    %467 = vmatpush1.msra.mxu0 %v442
    %468 = vmatprep.subr.mxu0 0.0
    %469 = vmatpush1.msra.mxu0 %v428
    %470 = vmatprep.subr.mxu0 0.0
    %471 = vmatpush1.msra.mxu0 %v427
    %472 = vmatprep.subr.mxu0 0.0
    %473 = vmatpush1.msra.mxu0 %v426
    %474 = vmatprep.subr.mxu0 0.0
    %475 = vmatpush1.msra.mxu0 %v425
    %476 = vmatprep.subr.mxu0 0.0
    %477 = vmatpush2.msra.mxu0 0.0
    %478 = vmatprep.subr.mxu0 0.0
    %479 = vmatpush2.msra.mxu0 0.0
    %480 = vmatprep.subr.mxu0 0.0
    %481 = vmatpush2.msra.mxu0 0.0
    %482 = vmatprep.subr.mxu0 0.0
    %483 = vmatpush2.msra.mxu0 0.0
    %484 = vmatprep.subr.mxu0 0.0
    %485 = vmatpush2.msra.mxu0 0.0
    %486 = vmatprep.subr.mxu0 0.0
    %487 = vmatpush2.msra.mxu0 0.0
    %488 = vmatprep.subr.mxu0 0.0
    %489 = vmatpush2.msra.mxu0 0.0
    %490 = vmatprep.subr.mxu0 0.0
    %491 = vmatpush2.msra.mxu0 0.0
    %492 = vmatprep.subr.mxu0 0.0
    %493 = vmatpush2.msra.mxu0 0.0
    %494 = vmatprep.subr.mxu0 0.0
    %495 = vmatpush2.msra.mxu0 0.0
    %496 = vmatprep.subr.mxu0 0.0
    %497 = vmatpush2.msra.mxu0 0.0
    %498 = vmatprep.subr.mxu0 0.0
    %499 = vmatpush2.msra.mxu0 0.0
    %500 = vmatprep.subr.mxu0 0.0
    %501 = vmatpush2.msra.mxu0 0.0
    %502 = vmatprep.subr.mxu0 0.0
    %503 = vmatpush2.msra.mxu0 0.0
    %504 = vmatprep.subr.mxu0 0.0
    %505 = vmatpush2.msra.mxu0 0.0
    %506 = vmatprep.subr.mxu0 0.0
    %507 = vmatpush2.msra.mxu0 0.0
    %508 = vmatprep.mubr.f32.mxu0 0.0
    %509 = vmatmul.mubr.f32.gmra.mxu0 %v439
    %v510 = vpop.f32.mrf.mxu0
    %v511 = vadd.f32 %v436, %v510
    %v512 = vpop.f32.mrf.mxu0
    %513 = vdwg.mxu0
    %vm514 = vcmp.ge.f32.partialorder %v511, 0.0
    %v515 = vmul.f32 %v511, 0.01
    %v516 = vsel %vm514, %v511, %v515
    %s517 = scalar_lea.vmem [#allocation2], 160
    %v518 = vld [vmem:[%s517] sm:$0xff]
    %v519 = vld [vmem:[%s517 + $0x8] sm:$0xff]
    %v520 = vld [vmem:[%s517 + $0x10] sm:$0xff]
    %v521 = vld [vmem:[%s517 + $0x18] sm:$0xff]
    %v522 = vld [vmem:[%s517 + $0x20] sm:$0xf]
    %s523 = scalar_lea.vmem %s4, 4
    %v524 = vld [vmem:[%s523] sm:$0x1]
    %v526 = vlaneseq
    %v527 = vshrl.u32 %v526, 7
    %v528 = vsub.s32 0, %v527
    %v529 = vrot.slane %v524, %v528
    %v532 = vsel %vm157, %v516, 0
    %v535 = vsel %vm161, %v522, 0
    %537 = vmatprep.subr.mxu0 0.0
    %538 = vmatpush1.msra.mxu0 0.0
    %539 = vmatprep.subr.mxu0 0.0
    %540 = vmatpush1.msra.mxu0 0.0
    %541 = vmatprep.subr.mxu0 0.0
    %542 = vmatpush1.msra.mxu0 0.0
    %543 = vmatprep.subr.mxu0 0.0
    %544 = vmatpush1.msra.mxu0 0.0
    %545 = vmatprep.subr.mxu0 0.0
    %546 = vmatpush1.msra.mxu0 0.0
    %547 = vmatprep.subr.mxu0 0.0
    %548 = vmatpush1.msra.mxu0 0.0
    %549 = vmatprep.subr.mxu0 0.0
    %550 = vmatpush1.msra.mxu0 0.0
    %551 = vmatprep.subr.mxu0 0.0
    %552 = vmatpush1.msra.mxu0 0.0
    %553 = vmatprep.subr.mxu0 0.0
    %554 = vmatpush1.msra.mxu0 0.0
    %555 = vmatprep.subr.mxu0 0.0
    %556 = vmatpush1.msra.mxu0 0.0
    %557 = vmatprep.subr.mxu0 0.0
    %558 = vmatpush1.msra.mxu0 0.0
    %559 = vmatprep.subr.mxu0 0.0
    %560 = vmatpush1.msra.mxu0 %v535
    %561 = vmatprep.subr.mxu0 0.0
    %562 = vmatpush1.msra.mxu0 %v521
    %563 = vmatprep.subr.mxu0 0.0
    %564 = vmatpush1.msra.mxu0 %v520
    %565 = vmatprep.subr.mxu0 0.0
    %566 = vmatpush1.msra.mxu0 %v519
    %567 = vmatprep.subr.mxu0 0.0
    %568 = vmatpush1.msra.mxu0 %v518
    %569 = vmatprep.subr.mxu0 0.0
    %570 = vmatpush2.msra.mxu0 0.0
    %571 = vmatprep.subr.mxu0 0.0
    %572 = vmatpush2.msra.mxu0 0.0
    %573 = vmatprep.subr.mxu0 0.0
    %574 = vmatpush2.msra.mxu0 0.0
    %575 = vmatprep.subr.mxu0 0.0
    %576 = vmatpush2.msra.mxu0 0.0
    %577 = vmatprep.subr.mxu0 0.0
    %578 = vmatpush2.msra.mxu0 0.0
    %579 = vmatprep.subr.mxu0 0.0
    %580 = vmatpush2.msra.mxu0 0.0
    %581 = vmatprep.subr.mxu0 0.0
    %582 = vmatpush2.msra.mxu0 0.0
    %583 = vmatprep.subr.mxu0 0.0
    %584 = vmatpush2.msra.mxu0 0.0
    %585 = vmatprep.subr.mxu0 0.0
    %586 = vmatpush2.msra.mxu0 0.0
    %587 = vmatprep.subr.mxu0 0.0
    %588 = vmatpush2.msra.mxu0 0.0
    %589 = vmatprep.subr.mxu0 0.0
    %590 = vmatpush2.msra.mxu0 0.0
    %591 = vmatprep.subr.mxu0 0.0
    %592 = vmatpush2.msra.mxu0 0.0
    %593 = vmatprep.subr.mxu0 0.0
    %594 = vmatpush2.msra.mxu0 0.0
    %595 = vmatprep.subr.mxu0 0.0
    %596 = vmatpush2.msra.mxu0 0.0
    %597 = vmatprep.subr.mxu0 0.0
    %598 = vmatpush2.msra.mxu0 0.0
    %599 = vmatprep.subr.mxu0 0.0
    %600 = vmatpush2.msra.mxu0 0.0
    %601 = vmatprep.mubr.f32.mxu0 0.0
    %602 = vmatmul.mubr.f32.gmra.mxu0 %v532
    %v603 = vpop.f32.mrf.mxu0
    %v604 = vadd.f32 %v529, %v603
    %v605 = vpop.f32.mrf.mxu0
    %606 = vdwg.mxu0
    %vm607 = vcmp.ge.f32.partialorder %v604, 0.0
    %v608 = vmul.f32 %v604, 0.01
    %v609 = vsel %vm607, %v604, %v608
    %s610 = scalar_lea.vmem [#allocation2], 200
    %v611 = vld [vmem:[%s610] sm:$0xff]
    %v612 = vld [vmem:[%s610 + $0x8] sm:$0xff]
    %v613 = vld [vmem:[%s610 + $0x10] sm:$0xff]
    %v614 = vld [vmem:[%s610 + $0x18] sm:$0xff]
    %v615 = vld [vmem:[%s610 + $0x20] sm:$0xf]
    %s616 = scalar_lea.vmem %s4, 5
    %v617 = vld [vmem:[%s616] sm:$0x1]
    %v619 = vlaneseq
    %v620 = vshrl.u32 %v619, 7
    %v621 = vsub.s32 0, %v620
    %v622 = vrot.slane %v617, %v621
    %v625 = vsel %vm157, %v609, 0
    %v628 = vsel %vm161, %v615, 0
    %630 = vmatprep.subr.mxu0 0.0
    %631 = vmatpush1.msra.mxu0 0.0
    %632 = vmatprep.subr.mxu0 0.0
    %633 = vmatpush1.msra.mxu0 0.0
    %634 = vmatprep.subr.mxu0 0.0
    %635 = vmatpush1.msra.mxu0 0.0
    %636 = vmatprep.subr.mxu0 0.0
    %637 = vmatpush1.msra.mxu0 0.0
    %638 = vmatprep.subr.mxu0 0.0
    %639 = vmatpush1.msra.mxu0 0.0
    %640 = vmatprep.subr.mxu0 0.0
    %641 = vmatpush1.msra.mxu0 0.0
    %642 = vmatprep.subr.mxu0 0.0
    %643 = vmatpush1.msra.mxu0 0.0
    %644 = vmatprep.subr.mxu0 0.0
    %645 = vmatpush1.msra.mxu0 0.0
    %646 = vmatprep.subr.mxu0 0.0
    %647 = vmatpush1.msra.mxu0 0.0
    %648 = vmatprep.subr.mxu0 0.0
    %649 = vmatpush1.msra.mxu0 0.0
    %650 = vmatprep.subr.mxu0 0.0
    %651 = vmatpush1.msra.mxu0 0.0
    %652 = vmatprep.subr.mxu0 0.0
    %653 = vmatpush1.msra.mxu0 %v628
    %654 = vmatprep.subr.mxu0 0.0
    %655 = vmatpush1.msra.mxu0 %v614
    %656 = vmatprep.subr.mxu0 0.0
    %657 = vmatpush1.msra.mxu0 %v613
    %658 = vmatprep.subr.mxu0 0.0
    %659 = vmatpush1.msra.mxu0 %v612
    %660 = vmatprep.subr.mxu0 0.0
    %661 = vmatpush1.msra.mxu0 %v611
    %662 = vmatprep.subr.mxu0 0.0
    %663 = vmatpush2.msra.mxu0 0.0
    %664 = vmatprep.subr.mxu0 0.0
    %665 = vmatpush2.msra.mxu0 0.0
    %666 = vmatprep.subr.mxu0 0.0
    %667 = vmatpush2.msra.mxu0 0.0
    %668 = vmatprep.subr.mxu0 0.0
    %669 = vmatpush2.msra.mxu0 0.0
    %670 = vmatprep.subr.mxu0 0.0
    %671 = vmatpush2.msra.mxu0 0.0
    %672 = vmatprep.subr.mxu0 0.0
    %673 = vmatpush2.msra.mxu0 0.0
    %674 = vmatprep.subr.mxu0 0.0
    %675 = vmatpush2.msra.mxu0 0.0
    %676 = vmatprep.subr.mxu0 0.0
    %677 = vmatpush2.msra.mxu0 0.0
    %678 = vmatprep.subr.mxu0 0.0
    %679 = vmatpush2.msra.mxu0 0.0
    %680 = vmatprep.subr.mxu0 0.0
    %681 = vmatpush2.msra.mxu0 0.0
    %682 = vmatprep.subr.mxu0 0.0
    %683 = vmatpush2.msra.mxu0 0.0
    %684 = vmatprep.subr.mxu0 0.0
    %685 = vmatpush2.msra.mxu0 0.0
    %686 = vmatprep.subr.mxu0 0.0
    %687 = vmatpush2.msra.mxu0 0.0
    %688 = vmatprep.subr.mxu0 0.0
    %689 = vmatpush2.msra.mxu0 0.0
    %690 = vmatprep.subr.mxu0 0.0
    %691 = vmatpush2.msra.mxu0 0.0
    %692 = vmatprep.subr.mxu0 0.0
    %693 = vmatpush2.msra.mxu0 0.0
    %694 = vmatprep.mubr.f32.mxu0 0.0
    %695 = vmatmul.mubr.f32.gmra.mxu0 %v625
    %v696 = vpop.f32.mrf.mxu0
    %v697 = vadd.f32 %v622, %v696
    %v698 = vpop.f32.mrf.mxu0
    %699 = vdwg.mxu0
    %vm700 = vcmp.ge.f32.partialorder %v697, 0.0
    %v701 = vmul.f32 %v697, 0.01
    %v702 = vsel %vm700, %v697, %v701
    %s703 = scalar_lea.vmem [#allocation2], 240
    %v704 = vld [vmem:[%s703] sm:$0xff]
    %v705 = vld [vmem:[%s703 + $0x8] sm:$0xff]
    %v706 = vld [vmem:[%s703 + $0x10] sm:$0xff]
    %v707 = vld [vmem:[%s703 + $0x18] sm:$0xff]
    %v708 = vld [vmem:[%s703 + $0x20] sm:$0xf]
    %s709 = scalar_lea.vmem %s4, 6
    %v710 = vld [vmem:[%s709] sm:$0x1]
    %v712 = vlaneseq
    %v713 = vshrl.u32 %v712, 7
    %v714 = vsub.s32 0, %v713
    %v715 = vrot.slane %v710, %v714
    %v718 = vsel %vm157, %v702, 0
    %v721 = vsel %vm161, %v708, 0
    %723 = vmatprep.subr.mxu0 0.0
    %724 = vmatpush1.msra.mxu0 0.0
    %725 = vmatprep.subr.mxu0 0.0
    %726 = vmatpush1.msra.mxu0 0.0
    %727 = vmatprep.subr.mxu0 0.0
    %728 = vmatpush1.msra.mxu0 0.0
    %729 = vmatprep.subr.mxu0 0.0
    %730 = vmatpush1.msra.mxu0 0.0
    %731 = vmatprep.subr.mxu0 0.0
    %732 = vmatpush1.msra.mxu0 0.0
    %733 = vmatprep.subr.mxu0 0.0
    %734 = vmatpush1.msra.mxu0 0.0
    %735 = vmatprep.subr.mxu0 0.0
    %736 = vmatpush1.msra.mxu0 0.0
    %737 = vmatprep.subr.mxu0 0.0
    %738 = vmatpush1.msra.mxu0 0.0
    %739 = vmatprep.subr.mxu0 0.0
    %740 = vmatpush1.msra.mxu0 0.0
    %741 = vmatprep.subr.mxu0 0.0
    %742 = vmatpush1.msra.mxu0 0.0
    %743 = vmatprep.subr.mxu0 0.0
    %744 = vmatpush1.msra.mxu0 0.0
    %745 = vmatprep.subr.mxu0 0.0
    %746 = vmatpush1.msra.mxu0 %v721
    %747 = vmatprep.subr.mxu0 0.0
    %748 = vmatpush1.msra.mxu0 %v707
    %749 = vmatprep.subr.mxu0 0.0
    %750 = vmatpush1.msra.mxu0 %v706
    %751 = vmatprep.subr.mxu0 0.0
    %752 = vmatpush1.msra.mxu0 %v705
    %753 = vmatprep.subr.mxu0 0.0
    %754 = vmatpush1.msra.mxu0 %v704
    %755 = vmatprep.subr.mxu0 0.0
    %756 = vmatpush2.msra.mxu0 0.0
    %757 = vmatprep.subr.mxu0 0.0
    %758 = vmatpush2.msra.mxu0 0.0
    %759 = vmatprep.subr.mxu0 0.0
    %760 = vmatpush2.msra.mxu0 0.0
    %761 = vmatprep.subr.mxu0 0.0
    %762 = vmatpush2.msra.mxu0 0.0
    %763 = vmatprep.subr.mxu0 0.0
    %764 = vmatpush2.msra.mxu0 0.0
    %765 = vmatprep.subr.mxu0 0.0
    %766 = vmatpush2.msra.mxu0 0.0
    %767 = vmatprep.subr.mxu0 0.0
    %768 = vmatpush2.msra.mxu0 0.0
    %769 = vmatprep.subr.mxu0 0.0
    %770 = vmatpush2.msra.mxu0 0.0
    %771 = vmatprep.subr.mxu0 0.0
    %772 = vmatpush2.msra.mxu0 0.0
    %773 = vmatprep.subr.mxu0 0.0
    %774 = vmatpush2.msra.mxu0 0.0
    %775 = vmatprep.subr.mxu0 0.0
    %776 = vmatpush2.msra.mxu0 0.0
    %777 = vmatprep.subr.mxu0 0.0
    %778 = vmatpush2.msra.mxu0 0.0
    %779 = vmatprep.subr.mxu0 0.0
    %780 = vmatpush2.msra.mxu0 0.0
    %781 = vmatprep.subr.mxu0 0.0
    %782 = vmatpush2.msra.mxu0 0.0
    %783 = vmatprep.subr.mxu0 0.0
    %784 = vmatpush2.msra.mxu0 0.0
    %785 = vmatprep.subr.mxu0 0.0
    %786 = vmatpush2.msra.mxu0 0.0
    %787 = vmatprep.mubr.f32.mxu0 0.0
    %788 = vmatmul.mubr.f32.gmra.mxu0 %v718
    %v789 = vpop.f32.mrf.mxu0
    %v790 = vadd.f32 %v715, %v789
    %v791 = vpop.f32.mrf.mxu0
    %792 = vdwg.mxu0
    %vm793 = vcmp.ge.f32.partialorder %v790, 0.0
    %v794 = vmul.f32 %v790, 0.01
    %v795 = vsel %vm793, %v790, %v794
    %s796 = scalar_lea.vmem [#allocation2], 280
    %v797 = vld [vmem:[%s796] sm:$0xff]
    %v798 = vld [vmem:[%s796 + $0x8] sm:$0xff]
    %v799 = vld [vmem:[%s796 + $0x10] sm:$0xff]
    %v800 = vld [vmem:[%s796 + $0x18] sm:$0xff]
    %v801 = vld [vmem:[%s796 + $0x20] sm:$0xf]
    %s802 = scalar_lea.vmem %s4, 7
    %v803 = vld [vmem:[%s802] sm:$0x1]
    %v805 = vlaneseq
    %v806 = vshrl.u32 %v805, 7
    %v807 = vsub.s32 0, %v806
    %v808 = vrot.slane %v803, %v807
    %v811 = vsel %vm157, %v795, 0
    %v814 = vsel %vm161, %v801, 0
    %816 = vmatprep.subr.mxu0 0.0
    %817 = vmatpush1.msra.mxu0 0.0
    %818 = vmatprep.subr.mxu0 0.0
    %819 = vmatpush1.msra.mxu0 0.0
    %820 = vmatprep.subr.mxu0 0.0
    %821 = vmatpush1.msra.mxu0 0.0
    %822 = vmatprep.subr.mxu0 0.0
    %823 = vmatpush1.msra.mxu0 0.0
    %824 = vmatprep.subr.mxu0 0.0
    %825 = vmatpush1.msra.mxu0 0.0
    %826 = vmatprep.subr.mxu0 0.0
    %827 = vmatpush1.msra.mxu0 0.0
    %828 = vmatprep.subr.mxu0 0.0
    %829 = vmatpush1.msra.mxu0 0.0
    %830 = vmatprep.subr.mxu0 0.0
    %831 = vmatpush1.msra.mxu0 0.0
    %832 = vmatprep.subr.mxu0 0.0
    %833 = vmatpush1.msra.mxu0 0.0
    %834 = vmatprep.subr.mxu0 0.0
    %835 = vmatpush1.msra.mxu0 0.0
    %836 = vmatprep.subr.mxu0 0.0
    %837 = vmatpush1.msra.mxu0 0.0
    %838 = vmatprep.subr.mxu0 0.0
    %839 = vmatpush1.msra.mxu0 %v814
    %840 = vmatprep.subr.mxu0 0.0
    %841 = vmatpush1.msra.mxu0 %v800
    %842 = vmatprep.subr.mxu0 0.0
    %843 = vmatpush1.msra.mxu0 %v799
    %844 = vmatprep.subr.mxu0 0.0
    %845 = vmatpush1.msra.mxu0 %v798
    %846 = vmatprep.subr.mxu0 0.0
    %847 = vmatpush1.msra.mxu0 %v797
    %848 = vmatprep.subr.mxu0 0.0
    %849 = vmatpush2.msra.mxu0 0.0
    %850 = vmatprep.subr.mxu0 0.0
    %851 = vmatpush2.msra.mxu0 0.0
    %852 = vmatprep.subr.mxu0 0.0
    %853 = vmatpush2.msra.mxu0 0.0
    %854 = vmatprep.subr.mxu0 0.0
    %855 = vmatpush2.msra.mxu0 0.0
    %856 = vmatprep.subr.mxu0 0.0
    %857 = vmatpush2.msra.mxu0 0.0
    %858 = vmatprep.subr.mxu0 0.0
    %859 = vmatpush2.msra.mxu0 0.0
    %860 = vmatprep.subr.mxu0 0.0
    %861 = vmatpush2.msra.mxu0 0.0
    %862 = vmatprep.subr.mxu0 0.0
    %863 = vmatpush2.msra.mxu0 0.0
    %864 = vmatprep.subr.mxu0 0.0
    %865 = vmatpush2.msra.mxu0 0.0
    %866 = vmatprep.subr.mxu0 0.0
    %867 = vmatpush2.msra.mxu0 0.0
    %868 = vmatprep.subr.mxu0 0.0
    %869 = vmatpush2.msra.mxu0 0.0
    %870 = vmatprep.subr.mxu0 0.0
    %871 = vmatpush2.msra.mxu0 0.0
    %872 = vmatprep.subr.mxu0 0.0
    %873 = vmatpush2.msra.mxu0 0.0
    %874 = vmatprep.subr.mxu0 0.0
    %875 = vmatpush2.msra.mxu0 0.0
    %876 = vmatprep.subr.mxu0 0.0
    %877 = vmatpush2.msra.mxu0 0.0
    %878 = vmatprep.subr.mxu0 0.0
    %879 = vmatpush2.msra.mxu0 0.0
    %880 = vmatprep.mubr.f32.mxu0 0.0
    %881 = vmatmul.mubr.f32.gmra.mxu0 %v811
    %v882 = vpop.f32.mrf.mxu0
    %v883 = vadd.f32 %v808, %v882
    %v884 = vpop.f32.mrf.mxu0
    %885 = vdwg.mxu0
    %vm886 = vcmp.ge.f32.partialorder %v883, 0.0
    %v887 = vmul.f32 %v883, 0.01
    %v888 = vsel %vm886, %v883, %v887
    %s889 = scalar_lea.vmem [#allocation2], 320
    %v890 = vld [vmem:[%s889] sm:$0xff]
    %v891 = vld [vmem:[%s889 + $0x8] sm:$0xff]
    %v892 = vld [vmem:[%s889 + $0x10] sm:$0xff]
    %v893 = vld [vmem:[%s889 + $0x18] sm:$0xff]
    %v894 = vld [vmem:[%s889 + $0x20] sm:$0xf]
    %s895 = scalar_lea.vmem %s4, 8
    %v896 = vld [vmem:[%s895] sm:$0x1]
    %v898 = vlaneseq
    %v899 = vshrl.u32 %v898, 7
    %v900 = vsub.s32 0, %v899
    %v901 = vrot.slane %v896, %v900
    %v904 = vsel %vm157, %v888, 0
    %v907 = vsel %vm161, %v894, 0
    %909 = vmatprep.subr.mxu0 0.0
    %910 = vmatpush1.msra.mxu0 0.0
    %911 = vmatprep.subr.mxu0 0.0
    %912 = vmatpush1.msra.mxu0 0.0
    %913 = vmatprep.subr.mxu0 0.0
    %914 = vmatpush1.msra.mxu0 0.0
    %915 = vmatprep.subr.mxu0 0.0
    %916 = vmatpush1.msra.mxu0 0.0
    %917 = vmatprep.subr.mxu0 0.0
    %918 = vmatpush1.msra.mxu0 0.0
    %919 = vmatprep.subr.mxu0 0.0
    %920 = vmatpush1.msra.mxu0 0.0
    %921 = vmatprep.subr.mxu0 0.0
    %922 = vmatpush1.msra.mxu0 0.0
    %923 = vmatprep.subr.mxu0 0.0
    %924 = vmatpush1.msra.mxu0 0.0
    %925 = vmatprep.subr.mxu0 0.0
    %926 = vmatpush1.msra.mxu0 0.0
    %927 = vmatprep.subr.mxu0 0.0
    %928 = vmatpush1.msra.mxu0 0.0
    %929 = vmatprep.subr.mxu0 0.0
    %930 = vmatpush1.msra.mxu0 0.0
    %931 = vmatprep.subr.mxu0 0.0
    %932 = vmatpush1.msra.mxu0 %v907
    %933 = vmatprep.subr.mxu0 0.0
    %934 = vmatpush1.msra.mxu0 %v893
    %935 = vmatprep.subr.mxu0 0.0
    %936 = vmatpush1.msra.mxu0 %v892
    %937 = vmatprep.subr.mxu0 0.0
    %938 = vmatpush1.msra.mxu0 %v891
    %939 = vmatprep.subr.mxu0 0.0
    %940 = vmatpush1.msra.mxu0 %v890
    %941 = vmatprep.subr.mxu0 0.0
    %942 = vmatpush2.msra.mxu0 0.0
    %943 = vmatprep.subr.mxu0 0.0
    %944 = vmatpush2.msra.mxu0 0.0
    %945 = vmatprep.subr.mxu0 0.0
    %946 = vmatpush2.msra.mxu0 0.0
    %947 = vmatprep.subr.mxu0 0.0
    %948 = vmatpush2.msra.mxu0 0.0
    %949 = vmatprep.subr.mxu0 0.0
    %950 = vmatpush2.msra.mxu0 0.0
    %951 = vmatprep.subr.mxu0 0.0
    %952 = vmatpush2.msra.mxu0 0.0
    %953 = vmatprep.subr.mxu0 0.0
    %954 = vmatpush2.msra.mxu0 0.0
    %955 = vmatprep.subr.mxu0 0.0
    %956 = vmatpush2.msra.mxu0 0.0
    %957 = vmatprep.subr.mxu0 0.0
    %958 = vmatpush2.msra.mxu0 0.0
    %959 = vmatprep.subr.mxu0 0.0
    %960 = vmatpush2.msra.mxu0 0.0
    %961 = vmatprep.subr.mxu0 0.0
    %962 = vmatpush2.msra.mxu0 0.0
    %963 = vmatprep.subr.mxu0 0.0
    %964 = vmatpush2.msra.mxu0 0.0
    %965 = vmatprep.subr.mxu0 0.0
    %966 = vmatpush2.msra.mxu0 0.0
    %967 = vmatprep.subr.mxu0 0.0
    %968 = vmatpush2.msra.mxu0 0.0
    %969 = vmatprep.subr.mxu0 0.0
    %970 = vmatpush2.msra.mxu0 0.0
    %971 = vmatprep.subr.mxu0 0.0
    %972 = vmatpush2.msra.mxu0 0.0
    %973 = vmatprep.mubr.f32.mxu0 0.0
    %974 = vmatmul.mubr.f32.gmra.mxu0 %v904
    %v975 = vpop.f32.mrf.mxu0
    %v976 = vadd.f32 %v901, %v975
    %v977 = vpop.f32.mrf.mxu0
    %978 = vdwg.mxu0
    %vm979 = vcmp.ge.f32.partialorder %v976, 0.0
    %v980 = vmul.f32 %v976, 0.01
    %v981 = vsel %vm979, %v976, %v980
    %v982 = vld [vmem:[#allocation5] sm:$0xff]
    %v983 = vld [vmem:[#allocation5 + $0x8] sm:$0xff]
    %v984 = vld [vmem:[#allocation5 + $0x10] sm:$0xff]
    %v985 = vld [vmem:[#allocation5 + $0x18] sm:$0xff]
    %v986 = vld [vmem:[#allocation5 + $0x20] sm:$0xf]
    %v987 = vld [vmem:[%s6] sm:$0x1]
    %v989 = vlaneseq
    %v990 = vshrl.u32 %v989, 7
    %v991 = vsub.s32 0, %v990
    %v992 = vrot.slane %v987, %v991
    %v995 = vsel %vm157, %v981, 0
    %v998 = vsel %vm161, %v986, 0
    %1000 = vmatprep.subr.mxu0 0.0
    %1001 = vmatpush1.msra.mxu0 0.0
    %1002 = vmatprep.subr.mxu0 0.0
    %1003 = vmatpush1.msra.mxu0 0.0
    %1004 = vmatprep.subr.mxu0 0.0
    %1005 = vmatpush1.msra.mxu0 0.0
    %1006 = vmatprep.subr.mxu0 0.0
    %1007 = vmatpush1.msra.mxu0 0.0
    %1008 = vmatprep.subr.mxu0 0.0
    %1009 = vmatpush1.msra.mxu0 0.0
    %1010 = vmatprep.subr.mxu0 0.0
    %1011 = vmatpush1.msra.mxu0 0.0
    %1012 = vmatprep.subr.mxu0 0.0
    %1013 = vmatpush1.msra.mxu0 0.0
    %1014 = vmatprep.subr.mxu0 0.0
    %1015 = vmatpush1.msra.mxu0 0.0
    %1016 = vmatprep.subr.mxu0 0.0
    %1017 = vmatpush1.msra.mxu0 0.0
    %1018 = vmatprep.subr.mxu0 0.0
    %1019 = vmatpush1.msra.mxu0 0.0
    %1020 = vmatprep.subr.mxu0 0.0
    %1021 = vmatpush1.msra.mxu0 0.0
    %1022 = vmatprep.subr.mxu0 0.0
    %1023 = vmatpush1.msra.mxu0 %v998
    %1024 = vmatprep.subr.mxu0 0.0
    %1025 = vmatpush1.msra.mxu0 %v985
    %1026 = vmatprep.subr.mxu0 0.0
    %1027 = vmatpush1.msra.mxu0 %v984
    %1028 = vmatprep.subr.mxu0 0.0
    %1029 = vmatpush1.msra.mxu0 %v983
    %1030 = vmatprep.subr.mxu0 0.0
    %1031 = vmatpush1.msra.mxu0 %v982
    %1032 = vmatprep.subr.mxu0 0.0
    %1033 = vmatpush2.msra.mxu0 0.0
    %1034 = vmatprep.subr.mxu0 0.0
    %1035 = vmatpush2.msra.mxu0 0.0
    %1036 = vmatprep.subr.mxu0 0.0
    %1037 = vmatpush2.msra.mxu0 0.0
    %1038 = vmatprep.subr.mxu0 0.0
    %1039 = vmatpush2.msra.mxu0 0.0
    %1040 = vmatprep.subr.mxu0 0.0
    %1041 = vmatpush2.msra.mxu0 0.0
    %1042 = vmatprep.subr.mxu0 0.0
    %1043 = vmatpush2.msra.mxu0 0.0
    %1044 = vmatprep.subr.mxu0 0.0
    %1045 = vmatpush2.msra.mxu0 0.0
    %1046 = vmatprep.subr.mxu0 0.0
    %1047 = vmatpush2.msra.mxu0 0.0
    %1048 = vmatprep.subr.mxu0 0.0
    %1049 = vmatpush2.msra.mxu0 0.0
    %1050 = vmatprep.subr.mxu0 0.0
    %1051 = vmatpush2.msra.mxu0 0.0
    %1052 = vmatprep.subr.mxu0 0.0
    %1053 = vmatpush2.msra.mxu0 0.0
    %1054 = vmatprep.subr.mxu0 0.0
    %1055 = vmatpush2.msra.mxu0 0.0
    %1056 = vmatprep.subr.mxu0 0.0
    %1057 = vmatpush2.msra.mxu0 0.0
    %1058 = vmatprep.subr.mxu0 0.0
    %1059 = vmatpush2.msra.mxu0 0.0
    %1060 = vmatprep.subr.mxu0 0.0
    %1061 = vmatpush2.msra.mxu0 0.0
    %1062 = vmatprep.subr.mxu0 0.0
    %1063 = vmatpush2.msra.mxu0 0.0
    %1064 = vmatprep.mubr.f32.mxu0 0.0
    %1065 = vmatmul.mubr.f32.gmra.mxu0 %v995
    %v1066 = vpop.f32.mrf.mxu0
    %v1067 = vadd.f32 %v992, %v1066
    %v1068 = vpop.f32.mrf.mxu0
    %1069 = vdwg.mxu0
    %vm1070 = vcmp.ge.f32.partialorder %v1067, 0.0
    %v1071 = vmul.f32 %v1067, 0.01
    %v1072 = vsel %vm1070, %v1067, %v1071
    %1073 = vst [vmem:[#allocation7] sm:$0xff] %v1072
    // Predicated region
    $region38: #{tpu_custom_call.1} parent=1 // pred_check
      _
    $region39: #{tpu_custom_call.1} parent=1 // pred_check_branch
      %1075 = sbr.rel (0) target = $region41
    $region40: #{tpu_custom_call.1} parent=1 // pred_region
      %s1077 = ssub.s32 128, 128
      %1078 = vsyncadd [#allocation4], %s1077
      %s1080 = sshll.u32 [#allocation7], 4
      %s1081 = int_to_ptr.vmem [resolvable:$true] %s1080
      %1083 = dma.vmem_to_hbm [thread:$0]  %s1081, 128, %s7, [#allocation4]
    $region41: #{tpu_custom_call.1} parent=1 // pred_fallthru
      _
    // Predicated region
    $region42: #{tpu_custom_call.1} parent=1 // pred_check
      _
    $region43: #{tpu_custom_call.1} parent=1 // pred_check_branch
      %1085 = sbr.rel (0) target = $region45
    $region44: #{tpu_custom_call.1} parent=1 // pred_region
      %1086 = dma.done [#allocation4], 128
    $region45: #{tpu_custom_call.1} parent=1 // pred_fallthru
      _
    %1087 = vsyncpa [#allocation3], 1
    %1088 = vsyncpa [#allocation6], 1
    %1089 = vsyncpa [#allocation4], 1

</llo_original>
